<compile_context>
chip_gen: v7x
topology: tpu7x:2x2x1
jax: 0.10.0
libtpu: 0.0.40
codegen_flags: <defaults>
</compile_context>

<pallas_src>
import jax
import jax.numpy as jnp
from jax.experimental import pallas as pl
from jax.experimental.pallas import tpu as pltpu


def _round_up(x, m):
    return (x + m - 1) // m * m


# ---------------------------------------------------------------------------
# Pallas kernel: fused complex conv (two small matmuls) + bias + ReLU
# ---------------------------------------------------------------------------
def _cconv_relu_kernel(pr_ref, pi_ref, wr_ref, wi_ref, b_ref, o_ref):
    # pr_ref / pi_ref : (TILE_M, K)   bf16 real / imag im2col patches
    # wr_ref          : (K, 2*Cout)   bf16 = [ wr |  wi]  (applied to real patches)
    # wi_ref          : (K, 2*Cout)   bf16 = [-wi |  wr]  (applied to imag patches)
    # b_ref           : (1, 2*Cout)   f32  = [br - bi | br + bi]
    # o_ref           : (TILE_M, 2*Cout) f32 = [relu(real) | relu(imag)]
    y = jnp.dot(pr_ref[...], wr_ref[...], preferred_element_type=jnp.float32)
    y = y + jnp.dot(pi_ref[...], wi_ref[...], preferred_element_type=jnp.float32)
    o_ref[...] = jnp.maximum(y + b_ref[...], 0.0)


# ---------------------------------------------------------------------------
# Glue: im2col (stride 2, pad 1, k=3) in plain JAX
# ---------------------------------------------------------------------------
def _im2col(x_nhwc, k=3, stride=2, pad=1):
    N, H, W, C = x_nhwc.shape
    xp = jnp.pad(x_nhwc, ((0, 0), (pad, pad), (pad, pad), (0, 0)))
    Ho = (H + 2 * pad - k) // stride + 1
    Wo = (W + 2 * pad - k) // stride + 1
    cols = []
    for dy in range(k):
        for dx in range(k):
            cols.append(xp[:, dy:dy + stride * Ho:stride,
                           dx:dx + stride * Wo:stride, :])
    # (N, Ho, Wo, k*k, C): (dy, dx) outer, channel inner -> matches (kh, kw, Cin)
    p = jnp.stack(cols, axis=3)
    return p.reshape(N, Ho, Wo, k * k * C), Ho, Wo


# ---------------------------------------------------------------------------
# Wrapper: CDown forward
# ---------------------------------------------------------------------------
def cdown_forward(x_complex, params, *, tile_m=1024):
    """x_complex: (N, Cin, H, W) complex64.  Returns (N, Cout, Ho, Wo) complex64."""
    wr, br, wi, bi = params           # wr/wi: (Cout, Cin, 3, 3); br/bi: (Cout,)
    Cout, Cin, kh, kw = wr.shape
    N = x_complex.shape[0]

    # bf16 activations end-to-end on the patch side (f32 accumulation in-kernel).
    xr = jnp.real(x_complex).astype(jnp.bfloat16)
    xi = jnp.imag(x_complex).astype(jnp.bfloat16)

    # NCHW -> NHWC, then im2col
    pr, Ho, Wo = _im2col(jnp.transpose(xr, (0, 2, 3, 1)))
    pi, _, _ = _im2col(jnp.transpose(xi, (0, 2, 3, 1)))

    M = N * Ho * Wo
    K = Cin * kh * kw                 # contraction dim, NOT padded in HBM
    NOUT = 2 * Cout                   # [real | imag], NOT padded to 128

    # M tiling: multiples of 16 (bf16 sublane packing); guarantee >= 2 grid steps
    # whenever M allows so the "parallel" grid axis can use both v7x TensorCores.
    m_aligned = _round_up(M, 16)
    TILE_M = min(tile_m, m_aligned)
    if m_aligned // TILE_M < 2 and m_aligned >= 32:
        TILE_M = _round_up((m_aligned + 1) // 2, 16)
    Mpad = _round_up(M, TILE_M)

    pr = jnp.pad(pr.reshape(M, K), ((0, Mpad - M), (0, 0)))
    pi = jnp.pad(pi.reshape(M, K), ((0, Mpad - M), (0, 0)))

    # (Cout, Cin, kh, kw) -> (kh, kw, Cin, Cout) -> (K, Cout), matching (dy,dx,Cin) patches
    wr2 = jnp.transpose(wr, (2, 3, 1, 0)).reshape(K, Cout).astype(jnp.float32)
    wi2 = jnp.transpose(wi, (2, 3, 1, 0)).reshape(K, Cout).astype(jnp.float32)
    w_r = jnp.concatenate([wr2, wi2], axis=1).astype(jnp.bfloat16)    # real patches
    w_i = jnp.concatenate([-wi2, wr2], axis=1).astype(jnp.bfloat16)   # imag patches
    b_row = jnp.concatenate([br - bi, br + bi]).astype(jnp.float32).reshape(1, NOUT)

    grid = (Mpad // TILE_M,)
    out = pl.pallas_call(
        _cconv_relu_kernel,
        out_shape=jax.ShapeDtypeStruct((Mpad, NOUT), jnp.float32),
        grid_spec=pltpu.PrefetchScalarGridSpec(
            num_scalar_prefetch=0,
            grid=grid,
            in_specs=[
                pl.BlockSpec((TILE_M, K), lambda i: (i, 0)),   # real patches (M-tiled)
                pl.BlockSpec((TILE_M, K), lambda i: (i, 0)),   # imag patches (M-tiled)
                pl.BlockSpec((K, NOUT), lambda i: (0, 0)),     # VMEM-resident weights
                pl.BlockSpec((K, NOUT), lambda i: (0, 0)),     # VMEM-resident weights
                pl.BlockSpec((1, NOUT), lambda i: (0, 0)),     # effective bias row
            ],
            out_specs=pl.BlockSpec((TILE_M, NOUT), lambda i: (i, 0)),
        ),
        compiler_params=pltpu.CompilerParams(
            dimension_semantics=("parallel",)),                # megacore shard on v7x
    )(pr, pi, w_r, w_i, b_row)

    out = out[:M]
    yr = jnp.transpose(out[:, 0:Cout].reshape(N, Ho, Wo, Cout), (0, 3, 1, 2))
    yi = jnp.transpose(out[:, Cout:NOUT].reshape(N, Ho, Wo, Cout), (0, 3, 1, 2))
    return jax.lax.complex(yr, yi)


# ---------------------------------------------------------------------------
# Pure-JAX reference (matches complexPyTorch ComplexConv2d + complex_relu), f32
# ---------------------------------------------------------------------------
def _ref_cdown(x_complex, params):
    wr, br, wi, bi = params

    def conv(x, w, b):
        y = jax.lax.conv_general_dilated(
            x, w, window_strides=(2, 2), padding=((1, 1), (1, 1)),
            dimension_numbers=("NCHW", "OIHW", "NCHW"))
        return y + b[None, :, None, None]

    xr = jnp.real(x_complex).astype(jnp.float32)
    xi = jnp.imag(x_complex).astype(jnp.float32)
    yr = conv(xr, wr, br) - conv(xi, wi, bi)
    yi = conv(xi, wr, br) + conv(xr, wi, bi)
    return jnp.maximum(yr, 0.0) + 1j * jnp.maximum(yi, 0.0)


if __name__ == "__main__":
    # Small shapes: batch=2, in_channels=4, out_channels=8, spatial=16x16
    N, Cin, Cout, H, W = 2, 4, 8, 16, 16

    key = jax.random.PRNGKey(0)
    k_xr, k_xi, k_wr, k_br, k_wi, k_bi = jax.random.split(key, 6)

    x = (jax.random.normal(k_xr, (N, Cin, H, W), jnp.float32)
         + 1j * jax.random.normal(k_xi, (N, Cin, H, W), jnp.float32)
         ).astype(jnp.complex64)

    # Deterministic parameter init (PyTorch-Conv2d-like uniform bound)
    fan_in = Cin * 3 * 3
    bound = 1.0 / (fan_in ** 0.5)
    wr = jax.random.uniform(k_wr, (Cout, Cin, 3, 3), jnp.float32, -bound, bound)
    br = jax.random.uniform(k_br, (Cout,), jnp.float32, -bound, bound)
    wi = jax.random.uniform(k_wi, (Cout, Cin, 3, 3), jnp.float32, -bound, bound)
    bi = jax.random.uniform(k_bi, (Cout,), jnp.float32, -bound, bound)
    params = (wr, br, wi, bi)

    out = cdown_forward(x, params)
    out = jax.block_until_ready(out)

    ref = _ref_cdown(x, params)
    assert out.shape == (N, Cout, H // 2, W // 2), out.shape
    # bf16 operands with f32 accumulation -> relaxed tolerance vs. the f32 reference.
    assert jnp.allclose(jnp.real(out), jnp.real(ref), atol=5e-2, rtol=5e-2)
    assert jnp.allclose(jnp.imag(out), jnp.imag(ref), atol=5e-2, rtol=5e-2)

    print("KERNEL_OK")
</pallas_src>

<mosaic_0001>
module attributes {stable_mosaic.version = 11 : i64} {
  func.func @_cconv_relu_kernel(%arg0: i32, %arg1: memref<64x36xbf16, #tpu.memory_space<vmem>>, %arg2: memref<64x36xbf16, #tpu.memory_space<vmem>>, %arg3: memref<36x16xbf16, #tpu.memory_space<vmem>>, %arg4: memref<36x16xbf16, #tpu.memory_space<vmem>>, %arg5: memref<1x16xf32, #tpu.memory_space<vmem>>, %arg6: memref<64x16xf32, #tpu.memory_space<vmem>>) attributes {dimension_semantics = [#tpu.dimension_semantics<parallel>], iteration_bounds = array<i64: 2>, scalar_prefetch = 0 : i64, scratch_operands = 0 : i64, tpu.core_type = #tpu.core_type<tc>, window_params = [{transform_indices = @transform_0, window_bounds = array<i64: 64, 36>}, {transform_indices = @transform_1, window_bounds = array<i64: 64, 36>}, {pipeline_mode = #tpu.pipeline_mode<synchronous>, transform_indices = @transform_2, window_bounds = array<i64: 36, 16>}, {pipeline_mode = #tpu.pipeline_mode<synchronous>, transform_indices = @transform_3, window_bounds = array<i64: 36, 16>}, {pipeline_mode = #tpu.pipeline_mode<synchronous>, transform_indices = @transform_4, window_bounds = array<i64: 1, 16>}, {transform_indices = @transform_5, window_bounds = array<i64: 64, 16>}]} {
    %c0 = arith.constant 0 : index
    %c0_0 = arith.constant 0 : index
    %0 = vector.load %arg1[%c0, %c0_0] : memref<64x36xbf16, #tpu.memory_space<vmem>>, vector<64x36xbf16>
    %c0_1 = arith.constant 0 : index
    %c0_2 = arith.constant 0 : index
    %1 = vector.load %arg3[%c0_1, %c0_2] : memref<36x16xbf16, #tpu.memory_space<vmem>>, vector<36x16xbf16>
    %cst = arith.constant dense<0.000000e+00> : vector<64x16xf32>
    %2 = tpu.matmul %0, %1, %cst {dimension_numbers = #tpu.dot_dimension_numbers<[1], [0], [0], [1], [0, 0, 1, 1], [], []>} : vector<64x36xbf16>, vector<36x16xbf16>, vector<64x16xf32> -> vector<64x16xf32>
    %c0_3 = arith.constant 0 : index
    %c0_4 = arith.constant 0 : index
    %3 = vector.load %arg2[%c0_3, %c0_4] : memref<64x36xbf16, #tpu.memory_space<vmem>>, vector<64x36xbf16>
    %c0_5 = arith.constant 0 : index
    %c0_6 = arith.constant 0 : index
    %4 = vector.load %arg4[%c0_5, %c0_6] : memref<36x16xbf16, #tpu.memory_space<vmem>>, vector<36x16xbf16>
    %cst_7 = arith.constant dense<0.000000e+00> : vector<64x16xf32>
    %5 = tpu.matmul %3, %4, %cst_7 {dimension_numbers = #tpu.dot_dimension_numbers<[1], [0], [0], [1], [0, 0, 1, 1], [], []>} : vector<64x36xbf16>, vector<36x16xbf16>, vector<64x16xf32> -> vector<64x16xf32>
    %6 = arith.addf %2, %5 : vector<64x16xf32>
    %c0_8 = arith.constant 0 : index
    %c0_9 = arith.constant 0 : index
    %7 = vector.load %arg5[%c0_8, %c0_9] : memref<1x16xf32, #tpu.memory_space<vmem>>, vector<1x16xf32>
    %8 = vector.broadcast %7 : vector<1x16xf32> to vector<64x16xf32>
    %9 = arith.addf %6, %8 : vector<64x16xf32>
    %cst_10 = arith.constant 0.000000e+00 : f32
    %10 = vector.broadcast %cst_10 : f32 to vector<64x16xf32>
    %11 = arith.maximumf %9, %10 : vector<64x16xf32>
    %c0_11 = arith.constant 0 : index
    %c0_12 = arith.constant 0 : index
    %12 = vector.load %arg6[%c0_11, %c0_12] : memref<64x16xf32, #tpu.memory_space<vmem>>, vector<64x16xf32>
    tpu.vector_store %arg6[%c0_11, %c0_12], %11 {strides = array<i32>} : memref<64x16xf32, #tpu.memory_space<vmem>>, vector<64x16xf32>,
    return
  }
  func.func @transform_0(%arg0: i32) -> (i32, i32) {
    %c0_i32 = arith.constant 0 : i32
    %c0_i32_0 = arith.constant 0 : i32
    return %arg0, %c0_i32 : i32, i32
  }
  func.func @transform_1(%arg0: i32) -> (i32, i32) {
    %c0_i32 = arith.constant 0 : i32
    %c0_i32_0 = arith.constant 0 : i32
    return %arg0, %c0_i32 : i32, i32
  }
  func.func @transform_2(%arg0: i32) -> (i32, i32) {
    %c0_i32 = arith.constant 0 : i32
    %c0_i32_0 = arith.constant 0 : i32
    %c0_i32_1 = arith.constant 0 : i32
    return %c0_i32, %c0_i32_0 : i32, i32
  }
  func.func @transform_3(%arg0: i32) -> (i32, i32) {
    %c0_i32 = arith.constant 0 : i32
    %c0_i32_0 = arith.constant 0 : i32
    %c0_i32_1 = arith.constant 0 : i32
    return %c0_i32, %c0_i32_0 : i32, i32
  }
  func.func @transform_4(%arg0: i32) -> (i32, i32) {
    %c0_i32 = arith.constant 0 : i32
    %c0_i32_0 = arith.constant 0 : i32
    %c0_i32_1 = arith.constant 0 : i32
    return %c0_i32, %c0_i32_0 : i32, i32
  }
  func.func @transform_5(%arg0: i32) -> (i32, i32) {
    %c0_i32 = arith.constant 0 : i32
    %c0_i32_0 = arith.constant 0 : i32
    return %arg0, %c0_i32 : i32, i32
  }
}

</mosaic_0001>

<llo_original>
// kernel: tpu_custom_call.1
$region0: #{tpu_custom_call.1}
  #allocation0 [shape = 'u32[]', space=smem, size = 0x4, offset = 0x4, fixed_abs, tag = 'smem constant byte address 0x4 - core index']
  #allocation1 [shape = 'u32[144,128]{1,0:T(1,128)}', space=vmem, size = 0x12000, scoped, tag = 'internal scratch']
  %s0 = inlined_call_operand.vmem [shape: bf16[128,36], index: 0, kind: input, shape index: {}]
  %s1 = inlined_call_operand.vmem [shape: bf16[128,36], index: 1, kind: input, shape index: {}]
  %s2 = inlined_call_operand.vmem [shape: bf16[36,16], index: 2, kind: input, shape index: {}]
  %s3 = inlined_call_operand.vmem [shape: bf16[36,16], index: 3, kind: input, shape index: {}]
  %s4 = inlined_call_operand.vmem [shape: f32[1,16], index: 4, kind: input, shape index: {}]
  %s5 = inlined_call_operand.vmem [shape: f32[128,16], index: 5, kind: output, shape index: {}]
  %s6 = sld [smem:[#allocation0]]
  $region53: #{tpu_custom_call.1} parent=0
    _
  %s8 = ssub.s32 1, %s6
  %s9 = scalar_select 0, %s8, %s6
  loop: start=0, step=1, limit=4
  $region2: #{tpu_custom_call.1} parent=0 // loop_pre_header
    _
  $region3: #{tpu_custom_call.1} parent=0 // loop_header
    %s11 = sphi 0, %s15
    %p12 = scmp.ge.s32.totalorder %s11, 4
    %s21 = sphi 0, %s23
    %s24 = sphi 0, %s21
    %s25 = sphi 0, %s24
    %s41 = sphi 0, %s25
    %s47 = sphi 0, %s49
    %s50 = sphi 0, %s47
    %s51 = sphi 0, %s50
    %s67 = sphi 0, %s51
    %s71 = sphi 0, %s71
    %s73 = sphi 0, %s71
    %s74 = sphi 0, %s73
    %s88 = sphi 0, %s74
    %s92 = sphi 0, %s92
    %s94 = sphi 0, %s92
    %s95 = sphi 0, %s94
    %s109 = sphi 0, %s95
    %s113 = sphi 0, %s113
    %s115 = sphi 0, %s113
    %s116 = sphi 0, %s115
    %s130 = sphi 0, %s116
    %s136 = sphi 0, %s138
    %s139 = sphi 0, %s136
    %s140 = sphi 0, %s139
    %s156 = sphi 0, %s140
  $region4: #{tpu_custom_call.1} parent=0 // loop_header_branch
    %14 = sbr.rel (%p12) target = $region8
  $region5: #{tpu_custom_call.1} parent=0 // loop_body
    %s16 = ssub.s32 %s11, 1
    %s17 = ssub.s32 %s11, 2
    %s18 = sadd.s32 %s11, 1
    %s19 = ssub.s32 %s11, %s18
    %p20 = scmp.eq.s32.totalorder %s19, 0
    %s22 = sadd.s32 %s21, 1
    %s23 = scalar_select %p20, %s21, %s22
    %p26 = pneg %p20
    %p27 = scmp.eq.s32.totalorder %s11, 1
    %p28 = por %p26, %p27
    %p29 = scmp.ne.s32.totalorder %s21, %s24
    %p30 = scmp.eq.s32.totalorder %s11, 0
    %p31 = por %p29, %p30
    %p32 = scmp.ne.s32.totalorder %s21, %s24
    %p33 = scmp.eq.s32.totalorder %s16, 1
    %p34 = por %p32, %p33
    %p35 = scmp.ne.s32.totalorder %s24, %s25
    %p36 = scmp.eq.s32.totalorder %s16, 0
    %p37 = por %p35, %p36
    %p38 = scmp.ne.s32.totalorder %s24, %s25
    %p39 = scmp.eq.s32.totalorder %s17, 1
    %p40 = por %p38, %p39
    %p42 = scmp.ne.s32.totalorder %s25, %s41
    %p43 = scmp.eq.s32.totalorder %s17, 0
    %p44 = por %p42, %p43
    %s45 = ssub.s32 %s11, %s18
    %p46 = scmp.eq.s32.totalorder %s45, 0
    %s48 = sadd.s32 %s47, 1
    %s49 = scalar_select %p46, %s47, %s48
    %p52 = pneg %p46
    %p53 = scmp.eq.s32.totalorder %s11, 1
    %p54 = por %p52, %p53
    %p55 = scmp.ne.s32.totalorder %s47, %s50
    %p56 = scmp.eq.s32.totalorder %s11, 0
    %p57 = por %p55, %p56
    %p58 = scmp.ne.s32.totalorder %s47, %s50
    %p59 = scmp.eq.s32.totalorder %s16, 1
    %p60 = por %p58, %p59
    %p61 = scmp.ne.s32.totalorder %s50, %s51
    %p62 = scmp.eq.s32.totalorder %s16, 0
    %p63 = por %p61, %p62
    %p64 = scmp.ne.s32.totalorder %s50, %s51
    %p65 = scmp.eq.s32.totalorder %s17, 1
    %p66 = por %p64, %p65
    %p68 = scmp.ne.s32.totalorder %s51, %s67
    %p69 = scmp.eq.s32.totalorder %s17, 0
    %p70 = por %p68, %p69
    %s72 = sadd.s32 %s71, 1
    %p75 = scmp.eq.s32.totalorder %s11, 1
    %p76 = scmp.ne.s32.totalorder %s71, %s73
    %p77 = scmp.eq.s32.totalorder %s11, 0
    %p78 = por %p76, %p77
    %p79 = scmp.ne.s32.totalorder %s71, %s73
    %p80 = scmp.eq.s32.totalorder %s16, 1
    %p81 = por %p79, %p80
    %p82 = scmp.ne.s32.totalorder %s73, %s74
    %p83 = scmp.eq.s32.totalorder %s16, 0
    %p84 = por %p82, %p83
    %p85 = scmp.ne.s32.totalorder %s73, %s74
    %p86 = scmp.eq.s32.totalorder %s17, 1
    %p87 = por %p85, %p86
    %p89 = scmp.ne.s32.totalorder %s74, %s88
    %p90 = scmp.eq.s32.totalorder %s17, 0
    %p91 = por %p89, %p90
    %s93 = sadd.s32 %s92, 1
    %p96 = scmp.eq.s32.totalorder %s11, 1
    %p97 = scmp.ne.s32.totalorder %s92, %s94
    %p98 = scmp.eq.s32.totalorder %s11, 0
    %p99 = por %p97, %p98
    %p100 = scmp.ne.s32.totalorder %s92, %s94
    %p101 = scmp.eq.s32.totalorder %s16, 1
    %p102 = por %p100, %p101
    %p103 = scmp.ne.s32.totalorder %s94, %s95
    %p104 = scmp.eq.s32.totalorder %s16, 0
    %p105 = por %p103, %p104
    %p106 = scmp.ne.s32.totalorder %s94, %s95
    %p107 = scmp.eq.s32.totalorder %s17, 1
    %p108 = por %p106, %p107
    %p110 = scmp.ne.s32.totalorder %s95, %s109
    %p111 = scmp.eq.s32.totalorder %s17, 0
    %p112 = por %p110, %p111
    %s114 = sadd.s32 %s113, 1
    %p117 = scmp.eq.s32.totalorder %s11, 1
    %p118 = scmp.ne.s32.totalorder %s113, %s115
    %p119 = scmp.eq.s32.totalorder %s11, 0
    %p120 = por %p118, %p119
    %p121 = scmp.ne.s32.totalorder %s113, %s115
    %p122 = scmp.eq.s32.totalorder %s16, 1
    %p123 = por %p121, %p122
    %p124 = scmp.ne.s32.totalorder %s115, %s116
    %p125 = scmp.eq.s32.totalorder %s16, 0
    %p126 = por %p124, %p125
    %p127 = scmp.ne.s32.totalorder %s115, %s116
    %p128 = scmp.eq.s32.totalorder %s17, 1
    %p129 = por %p127, %p128
    %p131 = scmp.ne.s32.totalorder %s116, %s130
    %p132 = scmp.eq.s32.totalorder %s17, 0
    %p133 = por %p131, %p132
    %s134 = ssub.s32 %s11, %s18
    %p135 = scmp.eq.s32.totalorder %s134, 0
    %s137 = sadd.s32 %s136, 1
    %s138 = scalar_select %p135, %s136, %s137
    %p141 = pneg %p135
    %p142 = scmp.eq.s32.totalorder %s11, 1
    %p143 = por %p141, %p142
    %p144 = scmp.ne.s32.totalorder %s136, %s139
    %p145 = scmp.eq.s32.totalorder %s11, 0
    %p146 = por %p144, %p145
    %p147 = scmp.ne.s32.totalorder %s136, %s139
    %p148 = scmp.eq.s32.totalorder %s16, 1
    %p149 = por %p147, %p148
    %p150 = scmp.ne.s32.totalorder %s139, %s140
    %p151 = scmp.eq.s32.totalorder %s16, 0
    %p152 = por %p150, %p151
    %p153 = scmp.ne.s32.totalorder %s139, %s140
    %p154 = scmp.eq.s32.totalorder %s17, 1
    %p155 = por %p153, %p154
    %p157 = scmp.ne.s32.totalorder %s140, %s156
    %p158 = scmp.eq.s32.totalorder %s17, 0
    %p159 = por %p157, %p158
    %p160 = scmp.le.s32.totalorder 1, %s11
    %p161 = scmp.lt.s32.totalorder %s11, 3
    %p162 = pnand %p160, %p161
    %p163 = pneg %p162
    // Predicated region
    $region9: #{tpu_custom_call.1} parent=5 // pred_check
      _
    $region10: #{tpu_custom_call.1} parent=5 // pred_check_branch
      %165 = sbr.rel (%p162) target = $region12
    $region11: #{tpu_custom_call.1} parent=5 // pred_region
      %s166 = ssub.s32 %s11, 1
      // Predicated region
      $region13: #{tpu_custom_call.1} parent=11 // pred_check
        %p167 = pneg %p84
      $region14: #{tpu_custom_call.1} parent=11 // pred_check_branch
        %169 = sbr.rel (%p167) target = $region16
      $region15: #{tpu_custom_call.1} parent=11 // pred_region
        _
      $region16: #{tpu_custom_call.1} parent=11 // pred_fallthru
        _
      // Predicated region
      $region17: #{tpu_custom_call.1} parent=11 // pred_check
        %p170 = pneg %p105
      $region18: #{tpu_custom_call.1} parent=11 // pred_check_branch
        %172 = sbr.rel (%p170) target = $region20
      $region19: #{tpu_custom_call.1} parent=11 // pred_region
        _
      $region20: #{tpu_custom_call.1} parent=11 // pred_fallthru
        _
      // Predicated region
      $region21: #{tpu_custom_call.1} parent=11 // pred_check
        %p173 = pneg %p126
      $region22: #{tpu_custom_call.1} parent=11 // pred_check_branch
        %175 = sbr.rel (%p173) target = $region24
      $region23: #{tpu_custom_call.1} parent=11 // pred_region
        _
      $region24: #{tpu_custom_call.1} parent=11 // pred_fallthru
        _
    $region12: #{tpu_custom_call.1} parent=5 // pred_fallthru
      _
    %p176 = scmp.lt.s32.totalorder %s11, 2
    // Predicated region
    $region25: #{tpu_custom_call.1} parent=5 // pred_check
      %p177 = pneg %p176
    $region26: #{tpu_custom_call.1} parent=5 // pred_check_branch
      %179 = sbr.rel (%p177) target = $region28
    $region27: #{tpu_custom_call.1} parent=5 // pred_region
      // Predicated region
      $region29: #{tpu_custom_call.1} parent=27 // pred_check
        %p180 = pneg %p31
      $region30: #{tpu_custom_call.1} parent=27 // pred_check_branch
        %182 = sbr.rel (%p180) target = $region32
      $region31: #{tpu_custom_call.1} parent=27 // pred_region
        %s183 = smul.u32 8, %s11
        %p184 = scmp.lt.s32.totalorder %s183, 15
        %s185 = scalar_select %p184, %s183, 15
        %s186 = smul.addr %s185, 4
        %s187 = scalar_lea.vmem %s0, %s186
        %s188 = smul.u32 8, %s11
      $region32: #{tpu_custom_call.1} parent=27 // pred_fallthru
        _
      // Predicated region
      $region33: #{tpu_custom_call.1} parent=27 // pred_check
        %p189 = pneg %p57
      $region34: #{tpu_custom_call.1} parent=27 // pred_check_branch
        %191 = sbr.rel (%p189) target = $region36
      $region35: #{tpu_custom_call.1} parent=27 // pred_region
        %s192 = smul.u32 8, %s11
        %p193 = scmp.lt.s32.totalorder %s192, 15
        %s194 = scalar_select %p193, %s192, 15
        %s195 = smul.addr %s194, 4
        %s196 = scalar_lea.vmem %s1, %s195
        %s197 = smul.u32 8, %s11
      $region36: #{tpu_custom_call.1} parent=27 // pred_fallthru
        _
    $region28: #{tpu_custom_call.1} parent=5 // pred_fallthru
      _
    %p198 = scmp.le.s32.totalorder 1, %s11
    %p199 = scmp.lt.s32.totalorder %s11, 3
    %p200 = pnand %p198, %p199
    %p201 = pneg %p200
    // Predicated region
    $region37: #{tpu_custom_call.1} parent=5 // pred_check
      _
    $region38: #{tpu_custom_call.1} parent=5 // pred_check_branch
      %203 = sbr.rel (%p200) target = $region40
    $region39: #{tpu_custom_call.1} parent=5 // pred_region
      %s204 = ssub.s32 %s11, 1
      %s205 = smul.u32 8, %s16
      %p206 = scmp.lt.s32.totalorder %s205, 15
      %s207 = scalar_select %p206, %s205, 15
      %s208 = smul.addr %s207, 4
      %s209 = scalar_lea.vmem %s0, %s208
      %p210 = pneg %p37
      %p211 = pneg %p34
      %s212 = smul.u32 8, %s16
      %p213 = scmp.lt.s32.totalorder %s212, 15
      %s214 = scalar_select %p213, %s212, 15
      %s215 = smul.addr %s214, 4
      %s216 = scalar_lea.vmem %s1, %s215
      %p217 = pneg %p63
      %p218 = pneg %p60
      %p219 = pneg %p84
      %p220 = pneg %p81
      %p221 = pneg %p105
      %p222 = pneg %p102
      %p223 = pneg %p126
      %p224 = pneg %p123
      %p225 = pneg %p152
      %p226 = pneg %p149
      %s227 = smul.u32 8, %s16
      %p228 = scmp.lt.s32.totalorder %s227, 15
      %s229 = scalar_select %p228, %s227, 15
      %s230 = smul.addr %s229, 8
      %s231 = scalar_lea.vmem %s5, %s230
      %s232 = smul.u32 8, %s16
      %p233 = scmp.lt.s32.totalorder %s232, 15
      %s234 = scalar_select %p233, %s232, 15
      %s235 = smul.addr %s234, 4
      %s236 = scalar_lea.vmem %s0, %s235
      %s237 = smul.u32 8, %s16
      %s238 = smul.u32 8, %s16
      %p239 = scmp.lt.s32.totalorder %s238, 15
      %s240 = scalar_select %p239, %s238, 15
      %s241 = smul.addr %s240, 4
      %s242 = scalar_lea.vmem %s1, %s241
      %s243 = smul.u32 8, %s16
      %s244 = smul.u32 8, %s16
      %p245 = scmp.lt.s32.totalorder %s244, 15
      %s246 = scalar_select %p245, %s244, 15
      %s247 = smul.addr %s246, 8
      %s248 = scalar_lea.vmem %s5, %s247
      %s249 = smul.u32 8, %s16
      %v251 = vld [vmem:[%s236] sm:$0xf]
      %v252 = vld [vmem:[%s236 + $0x4] sm:$0xf]
      %v253 = vld [vmem:[%s236 + $0x8] sm:$0xf]
      %v254 = vld [vmem:[%s236 + $0xc] sm:$0xf]
      %v255 = vld [vmem:[%s236 + $0x10] sm:$0xf]
      %v256 = vld [vmem:[%s236 + $0x14] sm:$0xf]
      %v257 = vld [vmem:[%s236 + $0x18] sm:$0xf]
      %v258 = vld [vmem:[%s236 + $0x1c] sm:$0xf]
      %v259 = vld [vmem:[%s2] sm:$0xf]
      %v260 = vld [vmem:[%s2 + $0x4] sm:$0xf]
      %v261 = vld [vmem:[%s2 + $0x8] sm:$0xf]
      %v262 = vld [vmem:[%s2 + $0xc] sm:$0xf]
      %v263 = vld [vmem:[%s2 + $0x10] sm:$0x3]
      %v264 = vld [vmem:[%s242] sm:$0xf]
      %v265 = vld [vmem:[%s242 + $0x4] sm:$0xf]
      %v266 = vld [vmem:[%s242 + $0x8] sm:$0xf]
      %v267 = vld [vmem:[%s242 + $0xc] sm:$0xf]
      %v268 = vld [vmem:[%s242 + $0x10] sm:$0xf]
      %v269 = vld [vmem:[%s242 + $0x14] sm:$0xf]
      %v270 = vld [vmem:[%s242 + $0x18] sm:$0xf]
      %v271 = vld [vmem:[%s242 + $0x1c] sm:$0xf]
      %v272 = vld [vmem:[%s3] sm:$0xf]
      %v273 = vld [vmem:[%s3 + $0x4] sm:$0xf]
      %v274 = vld [vmem:[%s3 + $0x8] sm:$0xf]
      %v275 = vld [vmem:[%s3 + $0xc] sm:$0xf]
      %v276 = vld [vmem:[%s3 + $0x10] sm:$0x3]
      %v285 = vunpack.c.l.b16 %v264
      %v286 = vunpack.c.l.b16 %v265
      %v287 = vunpack.c.l.b16 %v266
      %v288 = vunpack.c.l.b16 %v267
      %v289 = vunpack.c.l.b16 %v268
      %v290 = vunpack.c.l.b16 %v269
      %v291 = vunpack.c.l.b16 %v270
      %v292 = vunpack.c.l.b16 %v271
      %v293 = vpack.c.b16 %v286, %v285
      %v294 = vpack.c.b16 %v288, %v287
      %v295 = vpack.c.b16 %v290, %v289
      %v296 = vpack.c.b16 %v292, %v291
      %v302 = vunpack.c.l.b16 %v272
      %v303 = vunpack.c.l.b16 %v273
      %v304 = vunpack.c.l.b16 %v274
      %v305 = vunpack.c.l.b16 %v275
      %v306 = vunpack.c.l.b16 %v276
      %v307 = vpack.c.b16 %v303, %v302
      %v308 = vpack.c.b16 %v305, %v304
      %v309 = vpack.c.b16 %v306, %v306
      %vm312 = vcmask 293888
      %v314 = vsel %vm312, %v293, 0
      %v317 = vsel %vm312, %v294, 0
      %v320 = vsel %vm312, %v295, 0
      %v323 = vsel %vm312, %v296, 0
      %vm325 = vcmask 1041408
      %v327 = vsel %vm325, %v309, 0
      %329 = vmatprep.subr.bf16.mxu0 0
      %330 = vmatpush1.bf16.msra.mxu0 %v307
      %331 = vmatprep.subr.bf16.mxu0 0
      %332 = vmatpush1.bf16.msra.mxu0 %v308
      %333 = vmatprep.subr.bf16.mxu0 0
      %334 = vmatpush1.bf16.msra.mxu0 %v327
      %335 = vmatprep.subr.bf16.mxu0 0
      %336 = vmatpush1.bf16.msra.mxu0 0
      %337 = vmatprep.subr.bf16.mxu0 0
      %338 = vmatpush1.bf16.msra.mxu0 0
      %339 = vmatprep.subr.bf16.mxu0 0
      %340 = vmatpush1.bf16.msra.mxu0 0
      %341 = vmatprep.subr.bf16.mxu0 0
      %342 = vmatpush1.bf16.msra.mxu0 0
      %343 = vmatprep.subr.bf16.mxu0 0
      %344 = vmatpush1.bf16.msra.mxu0 0
      %345 = vmatprep.subr.bf16.mxu0 0
      %346 = vmatpush1.bf16.msra.mxu0 0
      %347 = vmatprep.subr.bf16.mxu0 0
      %348 = vmatpush1.bf16.msra.mxu0 0
      %349 = vmatprep.subr.bf16.mxu0 0
      %350 = vmatpush1.bf16.msra.mxu0 0
      %351 = vmatprep.subr.bf16.mxu0 0
      %352 = vmatpush1.bf16.msra.mxu0 0
      %353 = vmatprep.subr.bf16.mxu0 0
      %354 = vmatpush1.bf16.msra.mxu0 0
      %355 = vmatprep.subr.bf16.mxu0 0
      %356 = vmatpush1.bf16.msra.mxu0 0
      %357 = vmatprep.subr.bf16.mxu0 0
      %358 = vmatpush1.bf16.msra.mxu0 0
      %359 = vmatprep.subr.bf16.mxu0 0
      %360 = vmatpush1.bf16.msra.mxu0 0
      %361 = vmatprep.mubr.bf16.mxu0 0
      %362 = vmatmul.mubr.bf16.gmra.mrb[0].mxu0 %v314
      %v363 = vpop.f32.mrb[0].mxu0
      %v364 = vadd.f32 0.0, %v363
      %v365 = vpop.f32.mrb[0].mxu0
      %v366 = vpop.f32.mrb[0].mxu0
      %v367 = vadd.f32 0.0, %v366
      %v368 = vpop.f32.mrb[0].mxu0
      %369 = vmatprep.mubr.bf16.mxu0 0
      %370 = vmatmul.mubr.bf16.gmra.mrb[0].mxu0 %v317
      %v371 = vpop.f32.mrb[0].mxu0
      %v372 = vadd.f32 0.0, %v371
      %v373 = vpop.f32.mrb[0].mxu0
      %v374 = vpop.f32.mrb[0].mxu0
      %v375 = vadd.f32 0.0, %v374
      %v376 = vpop.f32.mrb[0].mxu0
      %377 = vmatprep.mubr.bf16.mxu0 0
      %378 = vmatmul.mubr.bf16.gmra.mrb[0].mxu0 %v320
      %v379 = vpop.f32.mrb[0].mxu0
      %v380 = vadd.f32 0.0, %v379
      %v381 = vpop.f32.mrb[0].mxu0
      %v382 = vpop.f32.mrb[0].mxu0
      %v383 = vadd.f32 0.0, %v382
      %v384 = vpop.f32.mrb[0].mxu0
      %385 = vmatprep.mubr.bf16.mxu0 0
      %386 = vmatmul.mubr.bf16.gmra.mrb[0].mxu0 %v323
      %v387 = vpop.f32.mrb[0].mxu0
      %v388 = vadd.f32 0.0, %v387
      %v389 = vpop.f32.mrb[0].mxu0
      %v390 = vpop.f32.mrb[0].mxu0
      %v391 = vadd.f32 0.0, %v390
      %v392 = vpop.f32.mrb[0].mxu0
      %393 = vdwg.mxu0
      %v402 = vunpack.c.l.b16 %v251
      %v403 = vunpack.c.l.b16 %v252
      %v404 = vunpack.c.l.b16 %v253
      %v405 = vunpack.c.l.b16 %v254
      %v406 = vunpack.c.l.b16 %v255
      %v407 = vunpack.c.l.b16 %v256
      %v408 = vunpack.c.l.b16 %v257
      %v409 = vunpack.c.l.b16 %v258
      %v410 = vpack.c.b16 %v403, %v402
      %v411 = vpack.c.b16 %v405, %v404
      %v412 = vpack.c.b16 %v407, %v406
      %v413 = vpack.c.b16 %v409, %v408
      %v419 = vunpack.c.l.b16 %v259
      %v420 = vunpack.c.l.b16 %v260
      %v421 = vunpack.c.l.b16 %v261
      %v422 = vunpack.c.l.b16 %v262
      %v423 = vunpack.c.l.b16 %v263
      %v424 = vpack.c.b16 %v420, %v419
      %v425 = vpack.c.b16 %v422, %v421
      %v426 = vpack.c.b16 %v423, %v423
      %v430 = vsel %vm312, %v410, 0
      %v433 = vsel %vm312, %v411, 0
      %v436 = vsel %vm312, %v412, 0
      %v439 = vsel %vm312, %v413, 0
      %v442 = vsel %vm325, %v426, 0
      %444 = vmatprep.subr.bf16.mxu0 0
      %445 = vmatpush1.bf16.msra.mxu0 %v424
      %446 = vmatprep.subr.bf16.mxu0 0
      %447 = vmatpush1.bf16.msra.mxu0 %v425
      %448 = vmatprep.subr.bf16.mxu0 0
      %449 = vmatpush1.bf16.msra.mxu0 %v442
      %450 = vmatprep.subr.bf16.mxu0 0
      %451 = vmatpush1.bf16.msra.mxu0 0
      %452 = vmatprep.subr.bf16.mxu0 0
      %453 = vmatpush1.bf16.msra.mxu0 0
      %454 = vmatprep.subr.bf16.mxu0 0
      %455 = vmatpush1.bf16.msra.mxu0 0
      %456 = vmatprep.subr.bf16.mxu0 0
      %457 = vmatpush1.bf16.msra.mxu0 0
      %458 = vmatprep.subr.bf16.mxu0 0
      %459 = vmatpush1.bf16.msra.mxu0 0
      %460 = vmatprep.subr.bf16.mxu0 0
      %461 = vmatpush1.bf16.msra.mxu0 0
      %462 = vmatprep.subr.bf16.mxu0 0
      %463 = vmatpush1.bf16.msra.mxu0 0
      %464 = vmatprep.subr.bf16.mxu0 0
      %465 = vmatpush1.bf16.msra.mxu0 0
      %466 = vmatprep.subr.bf16.mxu0 0
      %467 = vmatpush1.bf16.msra.mxu0 0
      %468 = vmatprep.subr.bf16.mxu0 0
      %469 = vmatpush1.bf16.msra.mxu0 0
      %470 = vmatprep.subr.bf16.mxu0 0
      %471 = vmatpush1.bf16.msra.mxu0 0
      %472 = vmatprep.subr.bf16.mxu0 0
      %473 = vmatpush1.bf16.msra.mxu0 0
      %474 = vmatprep.subr.bf16.mxu0 0
      %475 = vmatpush1.bf16.msra.mxu0 0
      %476 = vmatprep.mubr.bf16.mxu0 0
      %477 = vmatmul.mubr.bf16.gmra.mrb[0].mxu0 %v430
      %v478 = vpop.f32.mrb[0].mxu0
      %v479 = vadd.f32 %v364, %v478
      %v480 = vpop.f32.mrb[0].mxu0
      %v481 = vpop.f32.mrb[0].mxu0
      %v482 = vadd.f32 %v367, %v481
      %v483 = vpop.f32.mrb[0].mxu0
      %484 = vmatprep.mubr.bf16.mxu0 0
      %485 = vmatmul.mubr.bf16.gmra.mrb[0].mxu0 %v433
      %v486 = vpop.f32.mrb[0].mxu0
      %v487 = vadd.f32 %v372, %v486
      %v488 = vpop.f32.mrb[0].mxu0
      %v489 = vpop.f32.mrb[0].mxu0
      %v490 = vadd.f32 %v375, %v489
      %v491 = vpop.f32.mrb[0].mxu0
      %492 = vmatprep.mubr.bf16.mxu0 0
      %493 = vmatmul.mubr.bf16.gmra.mrb[0].mxu0 %v436
      %v494 = vpop.f32.mrb[0].mxu0
      %v495 = vadd.f32 %v380, %v494
      %v496 = vpop.f32.mrb[0].mxu0
      %v497 = vpop.f32.mrb[0].mxu0
      %v498 = vadd.f32 %v383, %v497
      %v499 = vpop.f32.mrb[0].mxu0
      %500 = vmatprep.mubr.bf16.mxu0 0
      %501 = vmatmul.mubr.bf16.gmra.mrb[0].mxu0 %v439
      %v502 = vpop.f32.mrb[0].mxu0
      %v503 = vadd.f32 %v388, %v502
      %v504 = vpop.f32.mrb[0].mxu0
      %v505 = vpop.f32.mrb[0].mxu0
      %v506 = vadd.f32 %v391, %v505
      %v507 = vpop.f32.mrb[0].mxu0
      %508 = vdwg.mxu0
      %v509 = vld [vmem:[%s4] sm:$0x1]
      %v511 = vlaneseq
      %v512 = vshrl.u32 %v511, 7
      %v513 = vsub.s32 0, %v512
      %v514 = vrot.slane %v509, %v513
      %v516 = vadd.f32 %v479, %v514
      %v517 = vadd.f32 %v482, %v514
      %v518 = vadd.f32 %v487, %v514
      %v519 = vadd.f32 %v490, %v514
      %v520 = vadd.f32 %v495, %v514
      %v521 = vadd.f32 %v498, %v514
      %v522 = vadd.f32 %v503, %v514
      %v523 = vadd.f32 %v506, %v514
      %v524 = vmax.f32 %v516, 0.0
      %v525 = vmax.f32 %v517, 0.0
      %v526 = vmax.f32 %v518, 0.0
      %v527 = vmax.f32 %v519, 0.0
      %v528 = vmax.f32 %v520, 0.0
      %v529 = vmax.f32 %v521, 0.0
      %v530 = vmax.f32 %v522, 0.0
      %v531 = vmax.f32 %v523, 0.0
      %vm532 = vcmask 130048
      %533 = vst.msk [vmem:[%s248] sm:$0xff] %vm532, %v524
      %534 = vst.msk [vmem:[%s248 + $0x8] sm:$0xff] %vm532, %v525
      %535 = vst.msk [vmem:[%s248 + $0x10] sm:$0xff] %vm532, %v526
      %536 = vst.msk [vmem:[%s248 + $0x18] sm:$0xff] %vm532, %v527
      %537 = vst.msk [vmem:[%s248 + $0x20] sm:$0xff] %vm532, %v528
      %538 = vst.msk [vmem:[%s248 + $0x28] sm:$0xff] %vm532, %v529
      %539 = vst.msk [vmem:[%s248 + $0x30] sm:$0xff] %vm532, %v530
      %540 = vst.msk [vmem:[%s248 + $0x38] sm:$0xff] %vm532, %v531
      %s541 = smul.u32 8, %s16
      %p542 = scmp.lt.s32.totalorder %s541, 15
      %s543 = scalar_select %p542, %s541, 15
      %s544 = smul.addr %s543, 8
      %s545 = scalar_lea.vmem %s5, %s544
      // Predicated region
      $region41: #{tpu_custom_call.1} parent=39 // pred_check
        %p546 = pneg %p149
      $region42: #{tpu_custom_call.1} parent=39 // pred_check_branch
        %548 = sbr.rel (%p546) target = $region44
      $region43: #{tpu_custom_call.1} parent=39 // pred_region
        %s549 = smul.u32 8, %s16
      $region44: #{tpu_custom_call.1} parent=39 // pred_fallthru
        _
    $region40: #{tpu_custom_call.1} parent=5 // pred_fallthru
      _
    %p550 = scmp.le.s32.totalorder 2, %s11
    // Predicated region
    $region45: #{tpu_custom_call.1} parent=5 // pred_check
      %p551 = pneg %p550
    $region46: #{tpu_custom_call.1} parent=5 // pred_check_branch
      %553 = sbr.rel (%p551) target = $region48
    $region47: #{tpu_custom_call.1} parent=5 // pred_region
      %s554 = ssub.s32 %s11, 2
      // Predicated region
      $region49: #{tpu_custom_call.1} parent=47 // pred_check
        %p555 = pneg %p155
      $region50: #{tpu_custom_call.1} parent=47 // pred_check_branch
        %557 = sbr.rel (%p555) target = $region52
      $region51: #{tpu_custom_call.1} parent=47 // pred_region
        %s558 = smul.u32 8, %s17
        %p559 = scmp.lt.s32.totalorder %s558, 15
        %s560 = scalar_select %p559, %s558, 15
        %s561 = smul.addr %s560, 8
        %s562 = scalar_lea.vmem %s5, %s561
      $region52: #{tpu_custom_call.1} parent=47 // pred_fallthru
        _
    $region48: #{tpu_custom_call.1} parent=5 // pred_fallthru
      _
  $region6: #{tpu_custom_call.1} parent=0 // loop_footer
    %s15 = sadd.s32 1, %s11
  $region7: #{tpu_custom_call.1} parent=0 // loop_footer_branch
    %10 = sbr.rel target = $region3
  $region8: #{tpu_custom_call.1} parent=0 // loop_exit
    _

</llo_original>
